<compile_context>
chip_gen: v5e
topology: v5e:2x2
jax: 0.10.0
libtpu: 0.0.40
codegen_flags: <defaults>
</compile_context>

<pallas_src>
import functools
import math

import jax
import jax.numpy as jnp
import numpy as np
from jax import lax
from jax.experimental import pallas as pl
from jax.experimental.pallas import tpu as pltpu


def _round_up(a, b):
    return -(-a // b) * b


def _vmem_capacity_bytes():
    """Physical VMEM per TensorCore (falls back to the v7x 64 MiB minimum)."""
    try:
        cap = int(pltpu.get_tpu_info().vmem_capacity_bytes)
        if cap > 0:
            return cap
    except Exception:
        pass
    return 64 * 1024 * 1024


def _default_oc_tile_cap():
    """MXU M-dim target: 256 on v6e/v7x, 128 on v5e (4x 128x128 MXU)."""
    try:
        kind = jax.devices()[0].device_kind.lower()
        if "v5 lite" in kind or "v5e" in kind or "v5litepod" in kind:
            return 128
    except Exception:
        pass
    return 256


# -----------------------------------------------------------------------------
# Kernel: one MXU matmul per OC tile over staged K*K tap windows + fused
# bias / activation / clamp epilogue.
# -----------------------------------------------------------------------------
def _conv_fold_kernel(w_ref, b_ref, slab_ref, o_ref, stack_ref, *,
                      K, Cp, TH, Wp, T_OC, OCT, weight_resident,
                      act, kernel_gain, clamp, alpha):
    # w_ref    : (OC, K*K*Cp) or (T_OC, K*K*Cp)  bf16  folded, pre-scaled weights
    # b_ref    : (T_OC, 1)                       f32   folded bias
    # slab_ref : (Cp, L)                         bf16  haloed input row slab
    # o_ref    : (T_OC, TH*Wp)                         output tile (flat rows)
    # stack_ref: (K*K*Cp, TH*Wp)                 bf16  staged tap windows
    o = pl.program_id(2)
    THW = TH * Wp

    # Stage the K*K shifted windows once per (n, row-tile); the OC grid axis is
    # 'arbitrary' (in-order, same core) so every OC tile reuses this buffer and
    # the unaligned lane shifts (XLU) are not re-done per OC tile.
    @pl.when(o == 0)
    def _():
        for t in range(K * K):
            kh, kw = divmod(t, K)
            stack_ref[pl.ds(t * Cp, Cp), :] = \
                slab_ref[:, pl.ds(kh * Wp + kw, THW)]

    if weight_resident and OCT > 1:
        off = pl.multiple_of(o * T_OC, T_OC)     # resident weights: slice my tile
        w = w_ref[pl.ds(off, T_OC), :]
    else:
        w = w_ref[...]

    # Single MXU matmul (contraction over K*K*Cp), f32 result; bias add fused.
    y = jnp.dot(w, stack_ref[...], preferred_element_type=jnp.float32) + b_ref[...]

    if act == "relu":
        y = jnp.maximum(y, 0.0)
    elif act == "lrelu":
        y = jnp.where(y >= 0.0, y, y * alpha)
    if kernel_gain != 1.0:                       # only when gain couldn't be folded
        y = y * kernel_gain
    if clamp is not None:
        y = jnp.clip(y, -clamp, clamp)
    o_ref[...] = y.astype(o_ref.dtype)


# -----------------------------------------------------------------------------
# Tiling heuristics ((8,128) block rules + full VMEM accounting)
# -----------------------------------------------------------------------------
def _choose_tiles(Cp, H, W, OC, K, pad, cd_bytes, out_bytes, budget, oc_cap,
                  force_row_split):
    """Pick (TH, Wp, T_OC, weight_resident, vmem_estimate_bytes).

    Accounts for every VMEM user: 2x slab, staging buffer, 2x weights,
    2x output block, f32 matmul-result/epilogue temps, bias.  Shrinks TH
    (rows) before T_OC so the MXU M dimension stays saturated.
    """
    Wp = _round_up(W + 2 * pad, 8)
    g = 128 // math.gcd(Wp, 128)            # TH granularity => (TH*Wp) % 128 == 0
    KKCp = K * K * Cp

    if OC % 8 != 0:
        oc_cands = [OC]                     # block must equal the full dim
    else:
        cap = max(8, (oc_cap // 8) * 8)
        oc_cands = [t for t in range(cap, 7, -8) if OC % t == 0] or [8]

    weight_resident = 2 * OC * KKCp * cd_bytes <= max(budget // 4, 1 << 20)

    th_limit = _round_up(H, g)
    if force_row_split and th_limit >= 2 * g:
        th_limit = _round_up((H + 1) // 2, g)   # N==1: give both v7x TCs work

    def vmem_bytes(th, t_oc):
        thw = th * Wp
        L = (th + 2 * pad) * Wp + 2 * pad
        return (2 * Cp * L * cd_bytes                         # double-buffered slab
                + KKCp * thw * cd_bytes                       # staged tap windows
                + (2 * OC if weight_resident else 2 * t_oc) * KKCp * cd_bytes
                + 2 * t_oc * thw * out_bytes                  # double-buffered output
                + 2 * t_oc * thw * 4                          # dot result + epilogue
                + 2 * OC * 4)                                 # bias

    for t_oc in oc_cands:
        th = th_limit
        while th >= g:
            if vmem_bytes(th, t_oc) <= budget:
                return th, Wp, t_oc, weight_resident, vmem_bytes(th, t_oc)
            th -= g
    # TODO(synk): nothing fits (huge C*K*K) -> would need to split the
    #             contraction over channels; fall back to the minimum tile.
    t_oc = oc_cands[-1]
    return g, Wp, t_oc, weight_resident, vmem_bytes(g, t_oc)


# -----------------------------------------------------------------------------
# Wrapper (mirrors Conv2dLayer.forward for up=1, down=1)
# -----------------------------------------------------------------------------
def conv2d_layer_forward(x, weight, bias=None, *, activation="linear",
                         conv_clamp=None, gain=1.0,
                         compute_dtype=jnp.bfloat16,
                         oc_tile_cap=None, vmem_budget_bytes=None):
    """x: (N, C, H, W); weight: (OC, C, K, K); bias: (OC,) or None."""
    N, C, H, W = x.shape
    OC, Cw, KH, KW = weight.shape
    assert Cw == C and KH == KW, "grouped / non-square kernels not supported"
    K = int(KH)
    assert K % 2 == 1, "even kernel_size ('same' padding path) not supported"
    pad = K // 2

    def_gains = {"linear": 1.0, "relu": float(np.sqrt(2.0)),
                 "lrelu": float(np.sqrt(2.0))}
    if activation not in def_gains:
        # TODO(synk): tanh/sigmoid/elu/selu/softplus/swish epilogues.
        raise NotImplementedError(f"activation {activation!r}")
    weight_gain = 1.0 / float(np.sqrt(C * K * K))
    act_gain = float(def_gains[activation] * gain)
    alpha = 0.2 if activation == "lrelu" else 0.0
    act_clamp = float(conv_clamp * gain) if conv_clamp is not None else None

    # relu/lrelu/linear are positively homogeneous: for act_gain > 0 fold the
    # output gain into the weights/bias and drop the epilogue multiply.
    if act_gain > 0.0:
        w_scale, b_scale, kernel_gain = weight_gain * act_gain, act_gain, 1.0
    else:
        w_scale, b_scale, kernel_gain = weight_gain, 1.0, act_gain

    cd_bytes = jnp.dtype(compute_dtype).itemsize
    out_bytes = x.dtype.itemsize
    Cp = _round_up(C, 8)                      # channel pad -> aligned staging rows
    cap = _vmem_capacity_bytes()
    budget = int(vmem_budget_bytes) if vmem_budget_bytes else int(cap * 0.55)
    oc_cap = int(oc_tile_cap) if oc_tile_cap else _default_oc_tile_cap()

    TH, Wp, T_OC, w_res, vmem_est = _choose_tiles(
        Cp, H, W, OC, K, pad, cd_bytes, out_bytes, budget, oc_cap,
        force_row_split=(N == 1))
    R = -(-H // TH)
    Hpad = R * TH
    OCT = OC // T_OC
    THW = TH * Wp
    KKCp = K * K * Cp
    L = (TH + 2 * pad) * Wp + 2 * pad

    vmem_limit = max(32 * 1024 * 1024, int(vmem_est * 1.4) + (2 << 20))
    vmem_limit = min(vmem_limit, int(cap * 0.9))
    vmem_limit = max(vmem_limit, min(vmem_est + (1 << 20), cap))

    # ---- host-side glue (one cheap pass over x / weight) --------------------
    # Zero-pad (C,H,W) -> (Cp, Hpad+2p, Wp), flatten rows, and pre-slice into
    # overlapping haloed row slabs so a plain BlockSpec auto-pipelines them
    # (next row-tile's slab DMA overlaps the current tile's OC sweep).
    x_pad = jnp.pad(x.astype(compute_dtype),
                    ((0, 0), (0, Cp - C),
                     (pad, pad + Hpad - H), (pad, Wp - W - pad)))
    x_flat = jnp.pad(x_pad.reshape(N, Cp, (Hpad + 2 * pad) * Wp),
                     ((0, 0), (0, 0), (0, 2 * pad)))
    if R == 1:
        slabs = x_flat[:, None]                                  # (N, 1, Cp, L)
    else:
        slabs = jnp.stack(
            [x_flat[:, :, r * THW: r * THW + L] for r in range(R)], axis=1)

    # Folded weights: (OC, K*K*Cp), rows ordered (kh, kw, c) to match the
    # staged window buffer; pre-scaled by weight_gain (* act_gain when folded).
    w_p = jnp.pad(weight.astype(jnp.float32) * w_scale,
                  ((0, 0), (0, Cp - C), (0, 0), (0, 0)))
    w_folded = w_p.transpose(0, 2, 3, 1).reshape(OC, KKCp).astype(compute_dtype)
    b_vec = bias if bias is not None else jnp.zeros((OC,), jnp.float32)
    b_col = (b_vec.astype(jnp.float32) * b_scale).reshape(OC, 1)

    if w_res:   # fetched once per call (constant block index), sliced in-kernel
        w_spec = pl.BlockSpec((OC, KKCp), lambda n, r, o: (0, 0))
    else:
        # TODO(synk): streamed weights are re-fetched every row tile; if the
        #             weights outweigh the input slabs, reorder the grid.
        w_spec = pl.BlockSpec((T_OC, KKCp), lambda n, r, o: (o, 0))
    b_spec = pl.BlockSpec((T_OC, 1), lambda n, r, o: (o, 0))

    kernel = functools.partial(
        _conv_fold_kernel, K=K, Cp=Cp, TH=TH, Wp=Wp, T_OC=T_OC, OCT=OCT,
        weight_resident=w_res, act=activation, kernel_gain=kernel_gain,
        clamp=act_clamp, alpha=alpha)

    cost = pl.CostEstimate(
        flops=int(2 * N * OC * KKCp * Hpad * Wp),
        transcendentals=0,
        bytes_accessed=int(slabs.size * cd_bytes
                           + w_folded.size * cd_bytes * (1 if w_res else N * R)
                           + N * OC * Hpad * Wp * out_bytes))

    out_wide = pl.pallas_call(
        kernel,
        out_shape=jax.ShapeDtypeStruct((N, OC, Hpad * Wp), x.dtype),
        grid_spec=pltpu.PrefetchScalarGridSpec(
            num_scalar_prefetch=0,
            grid=(N, R, OCT),
            in_specs=[
                w_spec,
                b_spec,
                pl.BlockSpec((None, None, Cp, L), lambda n, r, o: (n, r, 0, 0)),
            ],
            out_specs=pl.BlockSpec((None, T_OC, THW), lambda n, r, o: (n, o, r)),
            scratch_shapes=[pltpu.VMEM((KKCp, THW), compute_dtype)],
        ),
        compiler_params=pltpu.CompilerParams(
            dimension_semantics=("parallel", "parallel", "arbitrary"),
            vmem_limit_bytes=int(vmem_limit)),
        cost_estimate=cost,
    )(w_folded, b_col, slabs)

    # Drop padded rows/cols and restore NCHW.  (Consumers that accept the
    # padded (N, OC, Hpad, Wp) layout can skip this extra HBM pass.)
    return out_wide.reshape(N, OC, Hpad, Wp)[:, :, :H, :W]


# -----------------------------------------------------------------------------
# Pure-JAX reference (mirrors the torch code path for up=down=1)
# -----------------------------------------------------------------------------
def _reference(x, weight, bias, *, activation="linear", conv_clamp=None, gain=1.0):
    C, K = weight.shape[1], weight.shape[2]
    weight_gain = 1.0 / np.sqrt(C * K * K)
    y = lax.conv_general_dilated(
        x, weight * weight_gain, window_strides=(1, 1),
        padding=[(K // 2, K // 2), (K // 2, K // 2)],
        dimension_numbers=("NCHW", "OIHW", "NCHW"),
        precision=lax.Precision.HIGHEST)
    if bias is not None:
        y = y + bias.reshape(1, -1, 1, 1)
    if activation == "relu":
        y = jnp.maximum(y, 0.0)
    elif activation == "lrelu":
        y = jnp.where(y >= 0, y, y * 0.2)
    def_gain = {"linear": 1.0, "relu": np.sqrt(2.0), "lrelu": np.sqrt(2.0)}[activation]
    g = def_gain * gain
    if g != 1.0:
        y = y * g
    if conv_clamp is not None:
        y = jnp.clip(y, -conv_clamp * gain, conv_clamp * gain)
    return y


if __name__ == "__main__":
    key = jax.random.PRNGKey(0)
    k1, k2, k3, k4, k5, k6 = jax.random.split(key, 6)
    K = 3

    # --- case 1: default Conv2dLayer config (linear act, no clamp) -----------
    N, C, H, W, OC = 2, 4, 16, 16, 8
    x = jax.random.normal(k1, (N, C, H, W), dtype=jnp.float32)
    wgt = jax.random.normal(k2, (OC, C, K, K), dtype=jnp.float32)   # torch.randn init
    b = jnp.zeros((OC,), jnp.float32)                               # torch.zeros init
    out = jax.block_until_ready(conv2d_layer_forward(x, wgt, b))
    ref = _reference(x, wgt, b)
    np.testing.assert_allclose(np.asarray(out), np.asarray(ref), rtol=5e-2, atol=5e-2)
    assert out.shape == ref.shape and out.dtype == x.dtype

    # --- case 2: force row/OC tiling (tiny budget) + lrelu + clamp ------------
    N2, C2, H2, W2, OC2 = 2, 8, 32, 16, 16
    x2 = jax.random.normal(k3, (N2, C2, H2, W2), dtype=jnp.float32)
    w2 = jax.random.normal(k4, (OC2, C2, K, K), dtype=jnp.float32)
    b2 = 0.1 * jnp.arange(OC2, dtype=jnp.float32)
    out2 = jax.block_until_ready(conv2d_layer_forward(
        x2, w2, b2, activation="lrelu", conv_clamp=2.0, gain=1.0,
        vmem_budget_bytes=200_000, oc_tile_cap=8))
    ref2 = _reference(x2, w2, b2, activation="lrelu", conv_clamp=2.0, gain=1.0)
    np.testing.assert_allclose(np.asarray(out2), np.asarray(ref2), rtol=5e-2, atol=5e-2)

    # --- case 3: awkward dims, N=1 (forced row split), relu + gain, no bias ---
    N3, C3, H3, W3, OC3 = 1, 3, 20, 10, 12
    x3 = jax.random.normal(k5, (N3, C3, H3, W3), dtype=jnp.float32)
    w3 = jax.random.normal(k6, (OC3, C3, K, K), dtype=jnp.float32)
    out3 = jax.block_until_ready(conv2d_layer_forward(
        x3, w3, None, activation="relu", gain=1.3))
    ref3 = _reference(x3, w3, None, activation="relu", gain=1.3)
    np.testing.assert_allclose(np.asarray(out3), np.asarray(ref3), rtol=5e-2, atol=5e-2)

    print("KERNEL_OK")
</pallas_src>

<mosaic_0001>
module attributes {stable_mosaic.version = 11 : i64} {
  func.func @_conv_fold_kernel(%arg0: i32, %arg1: i32, %arg2: i32, %arg3: memref<8x72xbf16, #tpu.memory_space<vmem>>, %arg4: memref<8x1xf32, #tpu.memory_space<vmem>>, %arg5: memref<1x1x8x434xbf16, #tpu.memory_space<vmem>>, %arg6: memref<1x8x384xf32, #tpu.memory_space<vmem>>, %arg7: memref<72x384xbf16, #tpu.memory_space<vmem>>) attributes {dimension_semantics = [#tpu.dimension_semantics<parallel>, #tpu.dimension_semantics<parallel>, #tpu.dimension_semantics<arbitrary>], iteration_bounds = array<i64: 2, 1, 1>, scalar_prefetch = 0 : i64, scratch_operands = 1 : i64, tpu.core_type = #tpu.core_type<tc>, window_params = [{pipeline_mode = #tpu.pipeline_mode<synchronous>, transform_indices = @transform_0, window_bounds = array<i64: 8, 72>}, {transform_indices = @transform_1, window_bounds = array<i64: 8, 1>}, {transform_indices = @transform_2, window_bounds = array<i64: 1, 1, 8, 434>}, {transform_indices = @transform_3, window_bounds = array<i64: 1, 8, 384>}]} {
    %c0_i32 = arith.constant 0 : i32
    %0 = arith.cmpi eq, %arg2, %c0_i32 : i32
    %1 = arith.extui %0 : i1 to i32
    %c0_i32_0 = arith.constant 0 : i32
    %2 = arith.cmpi ne, %1, %c0_i32_0 : i32
    scf.if %2 {
      %c0_9 = arith.constant 0 : index
      %c0_10 = arith.constant 0 : index
      %c0_11 = arith.constant 0 : index
      %c0_12 = arith.constant 0 : index
      %12 = vector.load %arg5[%c0_9, %c0_10, %c0_11, %c0_12] : memref<1x1x8x434xbf16, #tpu.memory_space<vmem>>, vector<1x1x8x384xbf16>
      %13 = vector.shape_cast %12 : vector<1x1x8x384xbf16> to vector<8x384xbf16>
      %c0_13 = arith.constant 0 : index
      %c0_14 = arith.constant 0 : index
      %14 = vector.load %arg7[%c0_13, %c0_14] : memref<72x384xbf16, #tpu.memory_space<vmem>>, vector<8x384xbf16>
      tpu.vector_store %arg7[%c0_13, %c0_14], %13 {strides = array<i32>} : memref<72x384xbf16, #tpu.memory_space<vmem>>, vector<8x384xbf16>,
      %c0_15 = arith.constant 0 : index
      %c0_16 = arith.constant 0 : index
      %c0_17 = arith.constant 0 : index
      %c1 = arith.constant 1 : index
      %15 = vector.load %arg5[%c0_15, %c0_16, %c0_17, %c1] : memref<1x1x8x434xbf16, #tpu.memory_space<vmem>>, vector<1x1x8x384xbf16>
      %16 = vector.shape_cast %15 : vector<1x1x8x384xbf16> to vector<8x384xbf16>
      %c8 = arith.constant 8 : index
      %c0_18 = arith.constant 0 : index
      %17 = vector.load %arg7[%c8, %c0_18] : memref<72x384xbf16, #tpu.memory_space<vmem>>, vector<8x384xbf16>
      tpu.vector_store %arg7[%c8, %c0_18], %16 {strides = array<i32>} : memref<72x384xbf16, #tpu.memory_space<vmem>>, vector<8x384xbf16>,
      %c0_19 = arith.constant 0 : index
      %c0_20 = arith.constant 0 : index
      %c0_21 = arith.constant 0 : index
      %c2 = arith.constant 2 : index
      %18 = vector.load %arg5[%c0_19, %c0_20, %c0_21, %c2] : memref<1x1x8x434xbf16, #tpu.memory_space<vmem>>, vector<1x1x8x384xbf16>
      %19 = vector.shape_cast %18 : vector<1x1x8x384xbf16> to vector<8x384xbf16>
      %c16 = arith.constant 16 : index
      %c0_22 = arith.constant 0 : index
      %20 = vector.load %arg7[%c16, %c0_22] : memref<72x384xbf16, #tpu.memory_space<vmem>>, vector<8x384xbf16>
      tpu.vector_store %arg7[%c16, %c0_22], %19 {strides = array<i32>} : memref<72x384xbf16, #tpu.memory_space<vmem>>, vector<8x384xbf16>,
      %c0_23 = arith.constant 0 : index
      %c0_24 = arith.constant 0 : index
      %c0_25 = arith.constant 0 : index
      %c24 = arith.constant 24 : index
      %21 = vector.load %arg5[%c0_23, %c0_24, %c0_25, %c24] : memref<1x1x8x434xbf16, #tpu.memory_space<vmem>>, vector<1x1x8x384xbf16>
      %22 = vector.shape_cast %21 : vector<1x1x8x384xbf16> to vector<8x384xbf16>
      %c24_26 = arith.constant 24 : index
      %c0_27 = arith.constant 0 : index
      %23 = vector.load %arg7[%c24_26, %c0_27] : memref<72x384xbf16, #tpu.memory_space<vmem>>, vector<8x384xbf16>
      tpu.vector_store %arg7[%c24_26, %c0_27], %22 {strides = array<i32>} : memref<72x384xbf16, #tpu.memory_space<vmem>>, vector<8x384xbf16>,
      %c0_28 = arith.constant 0 : index
      %c0_29 = arith.constant 0 : index
      %c0_30 = arith.constant 0 : index
      %c25 = arith.constant 25 : index
      %24 = vector.load %arg5[%c0_28, %c0_29, %c0_30, %c25] : memref<1x1x8x434xbf16, #tpu.memory_space<vmem>>, vector<1x1x8x384xbf16>
      %25 = vector.shape_cast %24 : vector<1x1x8x384xbf16> to vector<8x384xbf16>
      %c32 = arith.constant 32 : index
      %c0_31 = arith.constant 0 : index
      %26 = vector.load %arg7[%c32, %c0_31] : memref<72x384xbf16, #tpu.memory_space<vmem>>, vector<8x384xbf16>
      tpu.vector_store %arg7[%c32, %c0_31], %25 {strides = array<i32>} : memref<72x384xbf16, #tpu.memory_space<vmem>>, vector<8x384xbf16>,
      %c0_32 = arith.constant 0 : index
      %c0_33 = arith.constant 0 : index
      %c0_34 = arith.constant 0 : index
      %c26 = arith.constant 26 : index
      %27 = vector.load %arg5[%c0_32, %c0_33, %c0_34, %c26] : memref<1x1x8x434xbf16, #tpu.memory_space<vmem>>, vector<1x1x8x384xbf16>
      %28 = vector.shape_cast %27 : vector<1x1x8x384xbf16> to vector<8x384xbf16>
      %c40 = arith.constant 40 : index
      %c0_35 = arith.constant 0 : index
      %29 = vector.load %arg7[%c40, %c0_35] : memref<72x384xbf16, #tpu.memory_space<vmem>>, vector<8x384xbf16>
      tpu.vector_store %arg7[%c40, %c0_35], %28 {strides = array<i32>} : memref<72x384xbf16, #tpu.memory_space<vmem>>, vector<8x384xbf16>,
      %c0_36 = arith.constant 0 : index
      %c0_37 = arith.constant 0 : index
      %c0_38 = arith.constant 0 : index
      %c48 = arith.constant 48 : index
      %30 = vector.load %arg5[%c0_36, %c0_37, %c0_38, %c48] : memref<1x1x8x434xbf16, #tpu.memory_space<vmem>>, vector<1x1x8x384xbf16>
      %31 = vector.shape_cast %30 : vector<1x1x8x384xbf16> to vector<8x384xbf16>
      %c48_39 = arith.constant 48 : index
      %c0_40 = arith.constant 0 : index
      %32 = vector.load %arg7[%c48_39, %c0_40] : memref<72x384xbf16, #tpu.memory_space<vmem>>, vector<8x384xbf16>
      tpu.vector_store %arg7[%c48_39, %c0_40], %31 {strides = array<i32>} : memref<72x384xbf16, #tpu.memory_space<vmem>>, vector<8x384xbf16>,
      %c0_41 = arith.constant 0 : index
      %c0_42 = arith.constant 0 : index
      %c0_43 = arith.constant 0 : index
      %c49 = arith.constant 49 : index
      %33 = vector.load %arg5[%c0_41, %c0_42, %c0_43, %c49] : memref<1x1x8x434xbf16, #tpu.memory_space<vmem>>, vector<1x1x8x384xbf16>
      %34 = vector.shape_cast %33 : vector<1x1x8x384xbf16> to vector<8x384xbf16>
      %c56 = arith.constant 56 : index
      %c0_44 = arith.constant 0 : index
      %35 = vector.load %arg7[%c56, %c0_44] : memref<72x384xbf16, #tpu.memory_space<vmem>>, vector<8x384xbf16>
      tpu.vector_store %arg7[%c56, %c0_44], %34 {strides = array<i32>} : memref<72x384xbf16, #tpu.memory_space<vmem>>, vector<8x384xbf16>,
      %c0_45 = arith.constant 0 : index
      %c0_46 = arith.constant 0 : index
      %c0_47 = arith.constant 0 : index
      %c50 = arith.constant 50 : index
      %36 = vector.load %arg5[%c0_45, %c0_46, %c0_47, %c50] : memref<1x1x8x434xbf16, #tpu.memory_space<vmem>>, vector<1x1x8x384xbf16>
      %37 = vector.shape_cast %36 : vector<1x1x8x384xbf16> to vector<8x384xbf16>
      %c64 = arith.constant 64 : index
      %c0_48 = arith.constant 0 : index
      %38 = vector.load %arg7[%c64, %c0_48] : memref<72x384xbf16, #tpu.memory_space<vmem>>, vector<8x384xbf16>
      tpu.vector_store %arg7[%c64, %c0_48], %37 {strides = array<i32>} : memref<72x384xbf16, #tpu.memory_space<vmem>>, vector<8x384xbf16>,
    } else {
    }
    %c0 = arith.constant 0 : index
    %c0_1 = arith.constant 0 : index
    %3 = vector.load %arg3[%c0, %c0_1] : memref<8x72xbf16, #tpu.memory_space<vmem>>, vector<8x72xbf16>
    %c0_2 = arith.constant 0 : index
    %c0_3 = arith.constant 0 : index
    %4 = vector.load %arg7[%c0_2, %c0_3] : memref<72x384xbf16, #tpu.memory_space<vmem>>, vector<72x384xbf16>
    %cst = arith.constant dense<0.000000e+00> : vector<8x384xf32>
    %5 = tpu.matmul %3, %4, %cst {dimension_numbers = #tpu.dot_dimension_numbers<[1], [0], [0], [1], [0, 0, 1, 1], [], []>} : vector<8x72xbf16>, vector<72x384xbf16>, vector<8x384xf32> -> vector<8x384xf32>
    %c0_4 = arith.constant 0 : index
    %c0_5 = arith.constant 0 : index
    %6 = vector.load %arg4[%c0_4, %c0_5] : memref<8x1xf32, #tpu.memory_space<vmem>>, vector<8x1xf32>
    %7 = vector.broadcast %6 : vector<8x1xf32> to vector<8x384xf32>
    %8 = arith.addf %5, %7 : vector<8x384xf32>
    %c0_6 = arith.constant 0 : index
    %c0_7 = arith.constant 0 : index
    %c0_8 = arith.constant 0 : index
    %9 = vector.load %arg6[%c0_6, %c0_7, %c0_8] : memref<1x8x384xf32, #tpu.memory_space<vmem>>, vector<1x8x384xf32>
    %10 = vector.shape_cast %9 : vector<1x8x384xf32> to vector<8x384xf32>
    %11 = vector.shape_cast %8 : vector<8x384xf32> to vector<1x8x384xf32>
    tpu.vector_store %arg6[%c0_6, %c0_7, %c0_8], %11 {strides = array<i32>} : memref<1x8x384xf32, #tpu.memory_space<vmem>>, vector<1x8x384xf32>,
    return
  }
  func.func @transform_0(%arg0: i32, %arg1: i32, %arg2: i32) -> (i32, i32) {
    %c0_i32 = arith.constant 0 : i32
    %c0_i32_0 = arith.constant 0 : i32
    %c0_i32_1 = arith.constant 0 : i32
    return %c0_i32, %c0_i32_0 : i32, i32
  }
  func.func @transform_1(%arg0: i32, %arg1: i32, %arg2: i32) -> (i32, i32) {
    %c0_i32 = arith.constant 0 : i32
    %c0_i32_0 = arith.constant 0 : i32
    return %arg2, %c0_i32 : i32, i32
  }
  func.func @transform_2(%arg0: i32, %arg1: i32, %arg2: i32) -> (i32, i32, i32, i32) {
    %c0_i32 = arith.constant 0 : i32
    %c0_i32_0 = arith.constant 0 : i32
    %c0_i32_1 = arith.constant 0 : i32
    return %arg0, %arg1, %c0_i32, %c0_i32_0 : i32, i32, i32, i32
  }
  func.func @transform_3(%arg0: i32, %arg1: i32, %arg2: i32) -> (i32, i32, i32) {
    %c0_i32 = arith.constant 0 : i32
    return %arg0, %arg2, %arg1 : i32, i32, i32
  }
}

</mosaic_0001>

<llo_original>
// kernel: tpu_custom_call.1
$region0: #{tpu_custom_call.1}
  #allocation0 [shape = 'u32[]', space=smem, size = 0x4, offset = 0x4, fixed_abs, tag = 'smem constant byte address 0x4 - core index']
  #allocation1 [shape = 'u32[72,128]{1,0:T(1,128)}', space=vmem, size = 0x9000, scoped, tag = 'internal scratch']
  #allocation2 [shape = 'bf16[72,384]{1,0:T(8,128)(2,1)}', space=vmem, size = 0xd800, scoped, tag = 'scratch operand']
  %s0 = inlined_call_operand.vmem [shape: bf16[8,72], index: 0, kind: input, shape index: {}]
  %s1 = inlined_call_operand.vmem [shape: f32[8,1], index: 1, kind: input, shape index: {}]
  %s2 = inlined_call_operand.hbm [shape: bf16[2,1,8,434], index: 2, kind: input, shape index: {}]
  %s3 = inlined_call_operand.hbm [shape: f32[2,8,384], index: 3, kind: output, shape index: {}]
  %s4 = sld [smem:[#allocation0]]
  $region53: #{tpu_custom_call.1} parent=0
    _
  %s6 = ssub.s32 1, %s4
  %s7 = scalar_select 0, %s6, %s4
  $region1: #{tpu_custom_call.1} parent=0
    #allocation3 [shape = 'u8[16384]{0}', space=vmem, size = 0x4000, scoped, tag = 'input window, operand 2']
    #allocation4 [shape = 's32[2]{0}', space=sflag, size = 0x8, scoped, tag = 'scoped memory for tpu_custom_call.1']
    #allocation5 [shape = 's32[2]{0}', space=sflag, size = 0x8, scoped, tag = 'scoped memory for tpu_custom_call.1']
    #allocation6 [shape = 'u8[24576]{0}', space=vmem, size = 0x6000, scoped, tag = 'output window, operand 0']
    %8 = vsyncpa [#allocation4], 0
    %s9 = scalar_lea.sflag [#allocation4], 1
    %10 = vsyncpa %s9, 0
    %11 = vsyncpa [#allocation5], 0
    %s12 = scalar_lea.sflag [#allocation5], 1
    %13 = vsyncpa %s12, 0
    loop: start=0, step=1, limit=4
    $region2: #{tpu_custom_call.1} parent=1 // loop_pre_header
      _
    $region3: #{tpu_custom_call.1} parent=1 // loop_header
      %s15 = sphi 0, %s19
      %p16 = scmp.ge.s32.totalorder %s15, 4
      %s22 = sphi 0, %s41
      %s23 = sphi 0, %s37
      %s24 = sphi 0, %s33
      %s25 = sphi 0, %s22
      %s26 = sphi 0, %s23
      %s27 = sphi 0, %s24
      %s28 = sphi 0, %s25
      %s29 = sphi 0, %s26
      %s30 = sphi 0, %s27
      %s42 = sphi 0, %s42
      %s44 = sphi 0, %s42
      %s45 = sphi 0, %s44
      %s59 = sphi 0, %s45
      %s65 = sphi 0, %s67
      %s68 = sphi 0, %s65
      %s69 = sphi 0, %s68
      %s85 = sphi 0, %s69
      %s93 = sphi 0, %s95
      %s96 = sphi 0, %s93
      %s97 = sphi 0, %s96
      %s113 = sphi 0, %s97
      %s123 = sphi 0, %s125
      %s126 = sphi 0, %s123
      %s127 = sphi 0, %s126
      %s143 = sphi 0, %s127
    $region4: #{tpu_custom_call.1} parent=1 // loop_header_branch
      %18 = sbr.rel (%p16) target = $region8
    $region5: #{tpu_custom_call.1} parent=1 // loop_body
      %s20 = ssub.s32 %s15, 1
      %s21 = ssub.s32 %s15, 2
      %s31 = sadd.s32 1, %s24
      %p32 = scmp.ge.s32.totalorder %s31, 1
      %s33 = scalar_select %p32, 0, %s31
      %s34 = sadd.s32 1, %s23
      %s35 = scalar_select %p32, %s34, %s23
      %p36 = scmp.ge.s32.totalorder %s35, 1
      %s37 = scalar_select %p36, 0, %s35
      %s38 = sadd.s32 1, %s22
      %s39 = scalar_select %p36, %s38, %s22
      %p40 = scmp.ge.s32.totalorder %s39, 2
      %s41 = scalar_select %p40, 0, %s39
      %s43 = sadd.s32 %s42, 1
      %p46 = scmp.eq.s32.totalorder %s15, 1
      %p47 = scmp.ne.s32.totalorder %s42, %s44
      %p48 = scmp.eq.s32.totalorder %s15, 0
      %p49 = por %p47, %p48
      %p50 = scmp.ne.s32.totalorder %s42, %s44
      %p51 = scmp.eq.s32.totalorder %s20, 1
      %p52 = por %p50, %p51
      %p53 = scmp.ne.s32.totalorder %s44, %s45
      %p54 = scmp.eq.s32.totalorder %s20, 0
      %p55 = por %p53, %p54
      %p56 = scmp.ne.s32.totalorder %s44, %s45
      %p57 = scmp.eq.s32.totalorder %s21, 1
      %p58 = por %p56, %p57
      %p60 = scmp.ne.s32.totalorder %s45, %s59
      %p61 = scmp.eq.s32.totalorder %s21, 0
      %p62 = por %p60, %p61
      %s63 = ssub.s32 %s24, %s33
      %p64 = scmp.eq.s32.totalorder %s63, 0
      %s66 = sadd.s32 %s65, 1
      %s67 = scalar_select %p64, %s65, %s66
      %p70 = pneg %p64
      %p71 = scmp.eq.s32.totalorder %s15, 1
      %p72 = por %p70, %p71
      %p73 = scmp.ne.s32.totalorder %s65, %s68
      %p74 = scmp.eq.s32.totalorder %s15, 0
      %p75 = por %p73, %p74
      %p76 = scmp.ne.s32.totalorder %s65, %s68
      %p77 = scmp.eq.s32.totalorder %s20, 1
      %p78 = por %p76, %p77
      %p79 = scmp.ne.s32.totalorder %s68, %s69
      %p80 = scmp.eq.s32.totalorder %s20, 0
      %p81 = por %p79, %p80
      %p82 = scmp.ne.s32.totalorder %s68, %s69
      %p83 = scmp.eq.s32.totalorder %s21, 1
      %p84 = por %p82, %p83
      %p86 = scmp.ne.s32.totalorder %s69, %s85
      %p87 = scmp.eq.s32.totalorder %s21, 0
      %p88 = por %p86, %p87
      %s89 = ssub.s32 %s22, %s41
      %s90 = ssub.s32 %s23, %s37
      %s91 = sor.u32 %s89, %s90
      %p92 = scmp.eq.s32.totalorder %s91, 0
      %s94 = sadd.s32 %s93, 1
      %s95 = scalar_select %p92, %s93, %s94
      %p98 = pneg %p92
      %p99 = scmp.eq.s32.totalorder %s15, 1
      %p100 = por %p98, %p99
      %p101 = scmp.ne.s32.totalorder %s93, %s96
      %p102 = scmp.eq.s32.totalorder %s15, 0
      %p103 = por %p101, %p102
      %p104 = scmp.ne.s32.totalorder %s93, %s96
      %p105 = scmp.eq.s32.totalorder %s20, 1
      %p106 = por %p104, %p105
      %p107 = scmp.ne.s32.totalorder %s96, %s97
      %p108 = scmp.eq.s32.totalorder %s20, 0
      %p109 = por %p107, %p108
      %p110 = scmp.ne.s32.totalorder %s96, %s97
      %p111 = scmp.eq.s32.totalorder %s21, 1
      %p112 = por %p110, %p111
      %p114 = scmp.ne.s32.totalorder %s97, %s113
      %p115 = scmp.eq.s32.totalorder %s21, 0
      %p116 = por %p114, %p115
      %s117 = ssub.s32 %s22, %s41
      %s118 = ssub.s32 %s24, %s33
      %s119 = sor.u32 %s117, %s118
      %s120 = ssub.s32 %s23, %s37
      %s121 = sor.u32 %s119, %s120
      %p122 = scmp.eq.s32.totalorder %s121, 0
      %s124 = sadd.s32 %s123, 1
      %s125 = scalar_select %p122, %s123, %s124
      %p128 = pneg %p122
      %p129 = scmp.eq.s32.totalorder %s15, 1
      %p130 = por %p128, %p129
      %p131 = scmp.ne.s32.totalorder %s123, %s126
      %p132 = scmp.eq.s32.totalorder %s15, 0
      %p133 = por %p131, %p132
      %p134 = scmp.ne.s32.totalorder %s123, %s126
      %p135 = scmp.eq.s32.totalorder %s20, 1
      %p136 = por %p134, %p135
      %p137 = scmp.ne.s32.totalorder %s126, %s127
      %p138 = scmp.eq.s32.totalorder %s20, 0
      %p139 = por %p137, %p138
      %p140 = scmp.ne.s32.totalorder %s126, %s127
      %p141 = scmp.eq.s32.totalorder %s21, 1
      %p142 = por %p140, %p141
      %p144 = scmp.ne.s32.totalorder %s127, %s143
      %p145 = scmp.eq.s32.totalorder %s21, 0
      %p146 = por %p144, %p145
      %p147 = scmp.le.s32.totalorder 1, %s15
      %p148 = scmp.lt.s32.totalorder %s15, 3
      %p149 = pnand %p147, %p148
      %p150 = pneg %p149
      // Predicated region
      $region9: #{tpu_custom_call.1} parent=5 // pred_check
        _
      $region10: #{tpu_custom_call.1} parent=5 // pred_check_branch
        %152 = sbr.rel (%p149) target = $region12
      $region11: #{tpu_custom_call.1} parent=5 // pred_region
        %s153 = ssub.s32 %s15, 1
        // Predicated region
        $region13: #{tpu_custom_call.1} parent=11 // pred_check
          %p154 = pneg %p55
        $region14: #{tpu_custom_call.1} parent=11 // pred_check_branch
          %156 = sbr.rel (%p154) target = $region16
        $region15: #{tpu_custom_call.1} parent=11 // pred_region
          _
        $region16: #{tpu_custom_call.1} parent=11 // pred_fallthru
          _
        // Predicated region
        $region17: #{tpu_custom_call.1} parent=11 // pred_check
          %p157 = pneg %p81
        $region18: #{tpu_custom_call.1} parent=11 // pred_check_branch
          %159 = sbr.rel (%p157) target = $region20
        $region19: #{tpu_custom_call.1} parent=11 // pred_region
          %p160 = scmp.lt.s32.totalorder %s27, 0
          %s161 = scalar_select %p160, %s27, 0
          %s162 = smul.addr %s161, 8
          %s163 = scalar_lea.vmem %s1, %s162
        $region20: #{tpu_custom_call.1} parent=11 // pred_fallthru
          _
      $region12: #{tpu_custom_call.1} parent=5 // pred_fallthru
        _
      %p164 = scmp.lt.s32.totalorder %s15, 2
      // Predicated region
      $region21: #{tpu_custom_call.1} parent=5 // pred_check
        %p165 = pneg %p164
      $region22: #{tpu_custom_call.1} parent=5 // pred_check_branch
        %167 = sbr.rel (%p165) target = $region24
      $region23: #{tpu_custom_call.1} parent=5 // pred_region
        // Predicated region
        $region25: #{tpu_custom_call.1} parent=23 // pred_check
          %p168 = pneg %p103
        $region26: #{tpu_custom_call.1} parent=23 // pred_check_branch
          %170 = sbr.rel (%p168) target = $region28
        $region27: #{tpu_custom_call.1} parent=23 // pred_region
          %s171 = sand.u32 %s93, 1
          %s172 = scalar_lea.sflag [#allocation4], %s171
          %s173 = sand.u32 %s93, 1
          %s174 = smul.addr %s173, 16
          %s175 = scalar_lea.vmem [#allocation3], %s174
          %177 = vsyncadd %s172, 0
          %s178 = smul.addr %s23, 4
          %s179 = smul.addr %s22, 4
          %s180 = sadd.s32 %s178, %s179
          %s181 = smul.addr %s180, 4
          %s182 = scalar_lea.hbm %s2, %s181
          %s184 = sshll.u32 %s182, 4
          %s185 = int_to_ptr.hbm [resolvable:$true] %s184
          %s186 = sshll.u32 %s175, 4
          %s187 = int_to_ptr.vmem [resolvable:$true] %s186
          %189 = dma.hbm_to_vmem [thread:$0]  %s185, 256, %s187, %s172
        $region28: #{tpu_custom_call.1} parent=23 // pred_fallthru
          _
      $region24: #{tpu_custom_call.1} parent=5 // pred_fallthru
        _
      %p190 = scmp.le.s32.totalorder 1, %s15
      %p191 = scmp.lt.s32.totalorder %s15, 3
      %p192 = pnand %p190, %p191
      %p193 = pneg %p192
      // Predicated region
      $region29: #{tpu_custom_call.1} parent=5 // pred_check
        _
      $region30: #{tpu_custom_call.1} parent=5 // pred_check_branch
        %195 = sbr.rel (%p192) target = $region32
      $region31: #{tpu_custom_call.1} parent=5 // pred_region
        %s196 = ssub.s32 %s15, 1
        %s197 = sand.u32 %s96, 1
        %s198 = scalar_lea.sflag [#allocation4], %s197
        %s199 = sand.u32 %s96, 1
        %s200 = smul.addr %s199, 16
        %s201 = scalar_lea.vmem [#allocation3], %s200
        // Predicated region
        $region33: #{tpu_custom_call.1} parent=31 // pred_check
          %p202 = pneg %p109
        $region34: #{tpu_custom_call.1} parent=31 // pred_check_branch
          %204 = sbr.rel (%p202) target = $region36
        $region35: #{tpu_custom_call.1} parent=31 // pred_region
          %206 = dma.done %s198, 256
        $region36: #{tpu_custom_call.1} parent=31 // pred_fallthru
          _
        %p207 = pneg %p55
        %p208 = pneg %p52
        %p209 = scmp.lt.s32.totalorder %s27, 0
        %s210 = scalar_select %p209, %s27, 0
        %s211 = smul.addr %s210, 8
        %s212 = scalar_lea.vmem %s1, %s211
        %p213 = pneg %p81
        %p214 = pneg %p78
        %s215 = sand.u32 %s96, 1
        %s216 = scalar_lea.sflag [#allocation4], %s215
        %s217 = sand.u32 %s96, 1
        %s218 = smul.addr %s217, 16
        %s219 = scalar_lea.vmem [#allocation3], %s218
        %p220 = pneg %p109
        %p221 = pneg %p106
        %p222 = pneg %p139
        %p223 = pneg %p136
        %s224 = sand.u32 %s126, 1
        %s225 = scalar_lea.sflag [#allocation5], %s224
        %s226 = sand.u32 %s126, 1
        %s227 = smul.addr %s226, 24
        %s228 = scalar_lea.vmem [#allocation6], %s227
        %p229 = scmp.lt.s32.totalorder %s27, 0
        %s230 = scalar_select %p229, %s27, 0
        %s231 = smul.addr %s230, 8
        %s232 = scalar_lea.vmem %s1, %s231
        %s233 = smul.u32 3, %s26
        %p235 = scmp.eq.s32.totalorder %s27, 0
        // Predicated region
        $region37: #{tpu_custom_call.1} parent=31 // pred_check
          %p236 = pneg %p235
        $region38: #{tpu_custom_call.1} parent=31 // pred_check_branch
          %238 = sbr.rel (%p236) target = $region40
        $region39: #{tpu_custom_call.1} parent=31 // pred_region
          %v239 = vld [vmem:[%s201] sm:$0xff]
          %v240 = vld [vmem:[%s201 + $0x8] sm:$0xf]
          %241 = vst [vmem:[#allocation2] sm:$0xff] %v239
          %242 = vst [vmem:[#allocation2 + $0x8] sm:$0xf] %v240
          %v243 = vld [vmem:[%s201] sm:$0xff]
          %v244 = vld [vmem:[%s201 + $0x8] sm:$0xff]
          %247 = vrot.lane.b32.xlu0 %v243, 127
          %v248 = vpop.permute.xlu0 %247
          %249 = vrot.lane.b32.xlu0 %v244, 127
          %v250 = vpop.permute.xlu0 %249
          %v251 = vrot.slane %v248, 4
          %v252 = vrot.slane %v250, 4
          %vm253 = vcmask 1043456
          %v254 = vsel %vm253, %v251, %v252
          %vm255 = vcmask 1039360
          %v256 = vsel %vm255, %v248, %v254
          %v257 = vsel %vm255, %v250, %v252
          %260 = vst [vmem:[#allocation2 + $0xc] sm:$0xff] %v256
          %261 = vst [vmem:[#allocation2 + $0x14] sm:$0xf] %v257
          %v262 = vld [vmem:[%s201] sm:$0xff]
          %v263 = vld [vmem:[%s201 + $0x8] sm:$0xff]
          %266 = vrot.lane.b32.xlu0 %v262, 126
          %v267 = vpop.permute.xlu0 %266
          %268 = vrot.lane.b32.xlu0 %v263, 126
          %v269 = vpop.permute.xlu0 %268
          %v270 = vrot.slane %v267, 4
          %v271 = vrot.slane %v269, 4
          %v272 = vsel %vm253, %v270, %v271
          %vm273 = vcmask 1031168
          %v274 = vsel %vm273, %v267, %v272
          %v275 = vsel %vm273, %v269, %v271
          %278 = vst [vmem:[#allocation2 + $0x18] sm:$0xff] %v274
          %279 = vst [vmem:[#allocation2 + $0x20] sm:$0xf] %v275
          %v280 = vld [vmem:[%s201] sm:$0xff]
          %v281 = vld [vmem:[%s201 + $0x8] sm:$0xff]
          %284 = vrot.lane.b32.xlu0 %v280, 104
          %v285 = vpop.permute.xlu0 %284
          %286 = vrot.lane.b32.xlu0 %v281, 104
          %v287 = vpop.permute.xlu0 %286
          %v288 = vrot.slane %v285, 4
          %v289 = vrot.slane %v287, 4
          %v290 = vsel %vm253, %v288, %v289
          %vm291 = vcmask 850944
          %v292 = vsel %vm291, %v285, %v290
          %v293 = vsel %vm291, %v287, %v289
          %296 = vst [vmem:[#allocation2 + $0x24] sm:$0xff] %v292
          %297 = vst [vmem:[#allocation2 + $0x2c] sm:$0xf] %v293
          %v298 = vld [vmem:[%s201] sm:$0xff]
          %v299 = vld [vmem:[%s201 + $0x8] sm:$0xff]
          %302 = vrot.lane.b32.xlu0 %v298, 103
          %v303 = vpop.permute.xlu0 %302
          %304 = vrot.lane.b32.xlu0 %v299, 103
          %v305 = vpop.permute.xlu0 %304
          %v306 = vrot.slane %v303, 4
          %v307 = vrot.slane %v305, 4
          %v308 = vsel %vm253, %v306, %v307
          %vm309 = vcmask 842752
          %v310 = vsel %vm309, %v303, %v308
          %v311 = vsel %vm309, %v305, %v307
          %314 = vst [vmem:[#allocation2 + $0x30] sm:$0xff] %v310
          %315 = vst [vmem:[#allocation2 + $0x38] sm:$0xf] %v311
          %v316 = vld [vmem:[%s201] sm:$0xff]
          %v317 = vld [vmem:[%s201 + $0x8] sm:$0xff]
          %320 = vrot.lane.b32.xlu0 %v316, 102
          %v321 = vpop.permute.xlu0 %320
          %322 = vrot.lane.b32.xlu0 %v317, 102
          %v323 = vpop.permute.xlu0 %322
          %v324 = vrot.slane %v321, 4
          %v325 = vrot.slane %v323, 4
          %v326 = vsel %vm253, %v324, %v325
          %vm327 = vcmask 834560
          %v328 = vsel %vm327, %v321, %v326
          %v329 = vsel %vm327, %v323, %v325
          %332 = vst [vmem:[#allocation2 + $0x3c] sm:$0xff] %v328
          %333 = vst [vmem:[#allocation2 + $0x44] sm:$0xf] %v329
          %v334 = vld [vmem:[%s201] sm:$0xff]
          %v335 = vld [vmem:[%s201 + $0x8] sm:$0xff]
          %338 = vrot.lane.b32.xlu0 %v334, 80
          %v339 = vpop.permute.xlu0 %338
          %340 = vrot.lane.b32.xlu0 %v335, 80
          %v341 = vpop.permute.xlu0 %340
          %v342 = vrot.slane %v339, 4
          %v343 = vrot.slane %v341, 4
          %v344 = vsel %vm253, %v342, %v343
          %vm345 = vcmask 654336
          %v346 = vsel %vm345, %v339, %v344
          %v347 = vsel %vm345, %v341, %v343
          %350 = vst [vmem:[#allocation2 + $0x48] sm:$0xff] %v346
          %351 = vst [vmem:[#allocation2 + $0x50] sm:$0xf] %v347
          %v352 = vld [vmem:[%s201] sm:$0xff]
          %v353 = vld [vmem:[%s201 + $0x8] sm:$0xff]
          %356 = vrot.lane.b32.xlu0 %v352, 79
          %v357 = vpop.permute.xlu0 %356
          %358 = vrot.lane.b32.xlu0 %v353, 79
          %v359 = vpop.permute.xlu0 %358
          %v360 = vrot.slane %v357, 4
          %v361 = vrot.slane %v359, 4
          %v362 = vsel %vm253, %v360, %v361
          %vm363 = vcmask 646144
          %v364 = vsel %vm363, %v357, %v362
          %v365 = vsel %vm363, %v359, %v361
          %368 = vst [vmem:[#allocation2 + $0x54] sm:$0xff] %v364
          %369 = vst [vmem:[#allocation2 + $0x5c] sm:$0xf] %v365
          %v370 = vld [vmem:[%s201] sm:$0xff]
          %v371 = vld [vmem:[%s201 + $0x8] sm:$0xff]
          %374 = vrot.lane.b32.xlu0 %v370, 78
          %v375 = vpop.permute.xlu0 %374
          %376 = vrot.lane.b32.xlu0 %v371, 78
          %v377 = vpop.permute.xlu0 %376
          %v378 = vrot.slane %v375, 4
          %v379 = vrot.slane %v377, 4
          %v380 = vsel %vm253, %v378, %v379
          %vm381 = vcmask 637952
          %v382 = vsel %vm381, %v375, %v380
          %v383 = vsel %vm381, %v377, %v379
          %386 = vst [vmem:[#allocation2 + $0x60] sm:$0xff] %v382
          %387 = vst [vmem:[#allocation2 + $0x68] sm:$0xf] %v383
        $region40: #{tpu_custom_call.1} parent=31 // pred_fallthru
          _
        %v388 = vld [vmem:[%s0] sm:$0xf]
        %v389 = vld [vmem:[#allocation2] sm:$0xff]
        %v390 = vld [vmem:[#allocation2 + $0x8] sm:$0xf]
        %v391 = vld [vmem:[#allocation2 + $0xc] sm:$0xff]
        %v392 = vld [vmem:[#allocation2 + $0x14] sm:$0xf]
        %v393 = vld [vmem:[#allocation2 + $0x18] sm:$0xff]
        %v394 = vld [vmem:[#allocation2 + $0x20] sm:$0xf]
        %v395 = vld [vmem:[#allocation2 + $0x24] sm:$0xff]
        %v396 = vld [vmem:[#allocation2 + $0x2c] sm:$0xf]
        %v397 = vld [vmem:[#allocation2 + $0x30] sm:$0xff]
        %v398 = vld [vmem:[#allocation2 + $0x38] sm:$0xf]
        %v399 = vld [vmem:[#allocation2 + $0x3c] sm:$0xff]
        %v400 = vld [vmem:[#allocation2 + $0x44] sm:$0xf]
        %v401 = vld [vmem:[#allocation2 + $0x48] sm:$0xff]
        %v402 = vld [vmem:[#allocation2 + $0x50] sm:$0xf]
        %v403 = vld [vmem:[#allocation2 + $0x54] sm:$0xff]
        %v404 = vld [vmem:[#allocation2 + $0x5c] sm:$0xf]
        %v405 = vld [vmem:[#allocation2 + $0x60] sm:$0xff]
        %v406 = vld [vmem:[#allocation2 + $0x68] sm:$0xf]
        %v407 = vld [vmem:[%s232] sm:$0xff]
        %409 = vset.pattern.permute.xlu0 0
        %410 = vperm.xlu0 %409, %v407
        %v411 = vpop.permute.xlu0 %410
        %v431 = vunpack.c.l.b16 %v389
        %v432 = vunpack.c.h.b16 %v389
        %v433 = vunpack.c.l.b16 %v390
        %v434 = vunpack.c.l.b16 %v391
        %v435 = vunpack.c.h.b16 %v391
        %v436 = vunpack.c.l.b16 %v392
        %v437 = vunpack.c.l.b16 %v393
        %v438 = vunpack.c.h.b16 %v393
        %v439 = vunpack.c.l.b16 %v394
        %v440 = vunpack.c.l.b16 %v395
        %v441 = vunpack.c.h.b16 %v395
        %v442 = vunpack.c.l.b16 %v396
        %v443 = vunpack.c.l.b16 %v397
        %v444 = vunpack.c.h.b16 %v397
        %v445 = vunpack.c.l.b16 %v398
        %v446 = vunpack.c.l.b16 %v399
        %v447 = vunpack.c.h.b16 %v399
        %v448 = vunpack.c.l.b16 %v400
        %v449 = vunpack.c.l.b16 %v401
        %v450 = vunpack.c.h.b16 %v401
        %v451 = vunpack.c.l.b16 %v402
        %v452 = vunpack.c.l.b16 %v403
        %v453 = vunpack.c.h.b16 %v403
        %v454 = vunpack.c.l.b16 %v404
        %v455 = vunpack.c.l.b16 %v405
        %v456 = vunpack.c.h.b16 %v405
        %v457 = vunpack.c.l.b16 %v406
        %v458 = vpack.c.b16 %v434, %v431
        %v459 = vpack.c.b16 %v435, %v432
        %v460 = vpack.c.b16 %v436, %v433
        %v461 = vpack.c.b16 %v440, %v437
        %v462 = vpack.c.b16 %v441, %v438
        %v463 = vpack.c.b16 %v442, %v439
        %v464 = vpack.c.b16 %v446, %v443
        %v465 = vpack.c.b16 %v447, %v444
        %v466 = vpack.c.b16 %v448, %v445
        %v467 = vpack.c.b16 %v452, %v449
        %v468 = vpack.c.b16 %v453, %v450
        %v469 = vpack.c.b16 %v454, %v451
        %v470 = vpack.c.b16 %v455, %v455
        %v471 = vpack.c.b16 %v456, %v456
        %v472 = vpack.c.b16 %v457, %v457
        %vm485 = vcmask 588800
        %v487 = vsel %vm485, %v388, 0
        %vm489 = vcmask 1043456
        %v491 = vsel %vm489, %v470, 0
        %v494 = vsel %vm489, %v471, 0
        %v497 = vsel %vm489, %v472, 0
        %499 = vmatpush.bf16.msra.mxu0 0
        %500 = vmatpush.bf16.msra.mxu0 0
        %501 = vmatpush.bf16.msra.mxu0 0
        %502 = vmatpush.bf16.msra.mxu0 %v491
        %503 = vmatpush.bf16.msra.mxu0 %v467
        %504 = vmatpush.bf16.msra.mxu0 %v464
        %505 = vmatpush.bf16.msra.mxu0 %v461
        %506 = vmatpush.bf16.msra.mxu0 %v458
        %507 = vmatmul.bf16.gmra.mxu0 %v487
        %v508 = vpop.f32.mrf.mxu0
        %v509 = vadd.f32 %v411, %v508
        %v510 = vpop.f32.mrf.mxu0
        %511 = vdwg.mxu0
        %512 = vmatpush.bf16.msra.mxu0 0
        %513 = vmatpush.bf16.msra.mxu0 0
        %514 = vmatpush.bf16.msra.mxu0 0
        %515 = vmatpush.bf16.msra.mxu0 %v494
        %516 = vmatpush.bf16.msra.mxu0 %v468
        %517 = vmatpush.bf16.msra.mxu0 %v465
        %518 = vmatpush.bf16.msra.mxu0 %v462
        %519 = vmatpush.bf16.msra.mxu0 %v459
        %520 = vmatmul.bf16.gmra.mxu0 %v487
        %v521 = vpop.f32.mrf.mxu0
        %v522 = vadd.f32 %v411, %v521
        %v523 = vpop.f32.mrf.mxu0
        %524 = vdwg.mxu0
        %525 = vmatpush.bf16.msra.mxu0 0
        %526 = vmatpush.bf16.msra.mxu0 0
        %527 = vmatpush.bf16.msra.mxu0 0
        %528 = vmatpush.bf16.msra.mxu0 %v497
        %529 = vmatpush.bf16.msra.mxu0 %v469
        %530 = vmatpush.bf16.msra.mxu0 %v466
        %531 = vmatpush.bf16.msra.mxu0 %v463
        %532 = vmatpush.bf16.msra.mxu0 %v460
        %533 = vmatmul.bf16.gmra.mxu0 %v487
        %v534 = vpop.f32.mrf.mxu0
        %v535 = vadd.f32 %v411, %v534
        %v536 = vpop.f32.mrf.mxu0
        %537 = vdwg.mxu0
        %538 = vst [vmem:[%s228] sm:$0xff] %v509
        %539 = vst [vmem:[%s228 + $0x8] sm:$0xff] %v522
        %540 = vst [vmem:[%s228 + $0x10] sm:$0xff] %v535
        %s541 = sand.u32 %s126, 1
        %s542 = scalar_lea.sflag [#allocation5], %s541
        %s543 = sand.u32 %s126, 1
        %s544 = smul.addr %s543, 24
        %s545 = scalar_lea.vmem [#allocation6], %s544
        // Predicated region
        $region41: #{tpu_custom_call.1} parent=31 // pred_check
          %p546 = pneg %p136
        $region42: #{tpu_custom_call.1} parent=31 // pred_check_branch
          %548 = sbr.rel (%p546) target = $region44
        $region43: #{tpu_custom_call.1} parent=31 // pred_region
          %s549 = smul.u32 3, %s26
          %551 = vsyncadd %s542, 0
          %s552 = smul.addr %s27, 3
          %s553 = sadd.s32 %s549, %s552
          %s554 = smul.addr %s25, 3
          %s555 = sadd.s32 %s553, %s554
          %s556 = smul.addr %s555, 8
          %s557 = scalar_lea.hbm %s3, %s556
          %s559 = sshll.u32 %s545, 4
          %s560 = int_to_ptr.vmem [resolvable:$true] %s559
          %s561 = sshll.u32 %s557, 4
          %s562 = int_to_ptr.hbm [resolvable:$true] %s561
          %564 = dma.vmem_to_hbm [thread:$0]  %s560, 384, %s562, %s542
        $region44: #{tpu_custom_call.1} parent=31 // pred_fallthru
          _
      $region32: #{tpu_custom_call.1} parent=5 // pred_fallthru
        _
      %p565 = scmp.le.s32.totalorder 2, %s15
      // Predicated region
      $region45: #{tpu_custom_call.1} parent=5 // pred_check
        %p566 = pneg %p565
      $region46: #{tpu_custom_call.1} parent=5 // pred_check_branch
        %568 = sbr.rel (%p566) target = $region48
      $region47: #{tpu_custom_call.1} parent=5 // pred_region
        %s569 = ssub.s32 %s15, 2
        // Predicated region
        $region49: #{tpu_custom_call.1} parent=47 // pred_check
          %p570 = pneg %p142
        $region50: #{tpu_custom_call.1} parent=47 // pred_check_branch
          %572 = sbr.rel (%p570) target = $region52
        $region51: #{tpu_custom_call.1} parent=47 // pred_region
          %s573 = sand.u32 %s127, 1
          %s574 = scalar_lea.sflag [#allocation5], %s573
          %s575 = sand.u32 %s127, 1
          %s576 = smul.addr %s575, 24
          %s577 = scalar_lea.vmem [#allocation6], %s576
          %579 = dma.done %s574, 384
        $region52: #{tpu_custom_call.1} parent=47 // pred_fallthru
          _
      $region48: #{tpu_custom_call.1} parent=5 // pred_fallthru
        _
    $region6: #{tpu_custom_call.1} parent=1 // loop_footer
      %s19 = sadd.s32 1, %s15
    $region7: #{tpu_custom_call.1} parent=1 // loop_footer_branch
      %14 = sbr.rel target = $region3
    $region8: #{tpu_custom_call.1} parent=1 // loop_exit
      _
    %580 = vsyncpa [#allocation4], 1
    %s581 = scalar_lea.sflag [#allocation4], 1
    %582 = vsyncpa %s581, 1
    %583 = vsyncpa [#allocation5], 1
    %s584 = scalar_lea.sflag [#allocation5], 1
    %585 = vsyncpa %s584, 1

</llo_original>
